<compile_context>
chip_gen: v6e
topology: v6e:2x2x1
jax: 0.10.0
libtpu: 0.0.40
codegen_flags: <defaults>
</compile_context>

<pallas_src>
import numpy as np
import jax
import jax.numpy as jnp
from jax.experimental import pallas as pl
from jax.experimental.pallas import tpu as pltpu

# Small synthetic configuration (original: model_dim=128, n_frames=128,
# n_rooms = number of impulse-response files on disk).
MODEL_DIM = 128   # model_dim (production value -> lane-dense last dim)
N_FRAMES  = 16    # n_frames = n_samples // step_size (reduced for the test)
N_ROOMS   = 8     # NeuralReverb.n_rooms
N_LAYERS  = 3     # LinearOutputStack depth
NEG_SLOPE = 0.2   # leaky_relu negative slope used by LinearOutputStack
BATCH     = 2


def audio_model_kernel(
    x_ref,     # (B, T, D)      dry signal, frames-major per batch element
    w0_ref,    # (D, 2D)        fused layer-0 weight  [to_rooms | to_mix]
    b0_ref,    # (1, 2D)        fused layer-0 bias
    wh_ref,    # (L-1, 2D, 2D)  fused block-diagonal hidden weights
    bh_ref,    # (L-1, 1, 2D)   fused hidden biases
    wo_ref,    # (2D, R+1)      fused block-diagonal output weight
    bo_ref,    # (1, R+1)       fused output bias
    rc_ref,    # (R, T, T)      per-room causal Toeplitz operators
    out_ref,   # (B, T, D)
):
    x = x_ref[...]                                              # (B, T, D)
    B, T, D = x.shape
    R = rc_ref.shape[0]

    # agg = x.mean(dim=-1) in PyTorch layout == mean over frames here.
    agg = jnp.sum(x, axis=1) * (1.0 / T)                        # (B, D)

    # Fused to_rooms / to_mix LinearOutputStack (block-diagonal weights):
    # one matmul chain with M = B rows instead of two M=1 chains.
    h = jnp.dot(agg, w0_ref[...], preferred_element_type=jnp.float32) + b0_ref[...]
    h = jnp.where(h > 0, h, NEG_SLOPE * h)
    for l in range(N_LAYERS - 1):
        h = jnp.dot(h, wh_ref[l], preferred_element_type=jnp.float32) + bh_ref[l]
        h = jnp.where(h > 0, h, NEG_SLOPE * h)
    logits = jnp.dot(h, wo_ref[...], preferred_element_type=jnp.float32) + bo_ref[...]  # (B, R+1)

    room_logits = logits[:, :R]                                 # (B, R)
    mix_logit = logits[:, R:R + 1]                              # (B, 1)

    # room = softmax(to_rooms(agg)), mix = sigmoid(to_mix(agg))
    room_logits = room_logits - jnp.max(room_logits, axis=-1, keepdims=True)
    room_exp = jnp.exp(room_logits)
    room = room_exp / jnp.sum(room_exp, axis=-1, keepdims=True)  # (B, R)
    mix = 1.0 / (1.0 + jnp.exp(-mix_logit))                      # (B, 1)

    # NeuralReverb:
    #   wet = Toeplitz(room @ impulses) @ dry
    #       = (sum_r room[r] * Toeplitz(impulses[r])) @ dry
    # The per-room Toeplitz operators are structural constants built in the
    # wrapper (R*T^2 instead of the old T^3 shift basis); the heavy contraction
    # (T,T)@(T,D) runs on the MXU.
    # TODO(synk): torch.fft-based convolution has no Pallas primitive; this is
    # the mathematically identical time-domain (causal Toeplitz) form.
    rc = rc_ref[...]                                             # (R, T, T)
    for b in range(B):                                           # static unroll (B small)
        conv = jnp.zeros((T, T), dtype=jnp.float32)
        for r in range(R):                                       # static unroll (R small)
            conv = conv + room[b:b + 1, r:r + 1] * rc[r]         # (1,1) bcast * (T,T)
        wet = jnp.dot(conv, x[b], preferred_element_type=jnp.float32)   # (T, D) on MXU
        m = mix[b:b + 1, :]                                      # (1,1)
        # signal = dry * mix + wet * (1 - mix)
        out_ref[b] = x[b] * m + wet * (1.0 - m)


# ----------------------------- glue / parameters -----------------------------

def make_params(key):
    keys = jax.random.split(key, 16)

    def lin(k, out_c, in_c):
        kw, kb = jax.random.split(k)
        bound = 1.0 / np.sqrt(in_c)
        w = jax.random.uniform(kw, (out_c, in_c), jnp.float32, -bound, bound)
        b = jax.random.uniform(kb, (out_c,), jnp.float32, -bound, bound)
        return w, b

    params = {
        "rooms_hidden": [lin(keys[i], MODEL_DIM, MODEL_DIM) for i in range(N_LAYERS)],
        "rooms_out": lin(keys[3], N_ROOMS, MODEL_DIM),
        "mix_hidden": [lin(keys[4 + i], MODEL_DIM, MODEL_DIM) for i in range(N_LAYERS)],
        "mix_out": lin(keys[7], 1, MODEL_DIM),
        # NeuralReverb.from_directory loads IRs from disk -> deterministic synthetic IRs
        "impulses": jax.random.uniform(keys[8], (N_ROOMS, N_FRAMES), jnp.float32, -0.01, 0.01),
    }
    return params


def kernel_inputs(p):
    """Precompute fused (block-diagonal) stack weights and per-room Toeplitz ops."""
    L = N_LAYERS

    def block_diag(a, b):
        m, n = a.shape
        q, s = b.shape
        top = jnp.concatenate([a, jnp.zeros((m, s), a.dtype)], axis=1)
        bot = jnp.concatenate([jnp.zeros((q, n), b.dtype), b], axis=1)
        return jnp.concatenate([top, bot], axis=0)

    wr = [w for w, _ in p["rooms_hidden"]]
    br = [b for _, b in p["rooms_hidden"]]
    wm = [w for w, _ in p["mix_hidden"]]
    bm = [b for _, b in p["mix_hidden"]]

    # Layer 0: both stacks consume the same `agg` -> concatenated weight.
    w0 = jnp.concatenate([wr[0].T, wm[0].T], axis=1)                     # (D, 2D)
    b0 = jnp.concatenate([br[0], bm[0]])[None, :]                        # (1, 2D)
    # Layers 1..L-1: block-diagonal so the two streams stay independent.
    wh = jnp.stack([block_diag(wr[l].T, wm[l].T) for l in range(1, L)])  # (L-1, 2D, 2D)
    bh = jnp.stack([jnp.concatenate([br[l], bm[l]])[None, :] for l in range(1, L)])  # (L-1, 1, 2D)
    # Output layer: block-diagonal -> (room logits | mix logit).
    wo = block_diag(p["rooms_out"][0].T, p["mix_out"][0].T)              # (2D, R+1)
    bo = jnp.concatenate([p["rooms_out"][1], p["mix_out"][1]])[None, :]  # (1, R+1)

    # Per-room causal Toeplitz operators: RC[r, t, k] = impulses[r, t-k] if t>=k else 0.
    t = np.arange(N_FRAMES)
    diff = t[:, None] - t[None, :]                                       # (T, T)
    mask = jnp.asarray(diff >= 0)
    idx = jnp.asarray(np.clip(diff, 0, N_FRAMES - 1))
    rc = jnp.where(mask[None], p["impulses"][:, idx], 0.0).astype(jnp.float32)  # (R, T, T)

    return (w0, b0, wh, bh, wo, bo, rc)


def audio_model_forward(x, params):
    B = x.shape[0]
    D, T = MODEL_DIM, N_FRAMES
    # x.view(-1, model_dim, n_frames), then to kernel layout (B, T, D)
    x_btd = jnp.transpose(x.reshape(B, D, T), (0, 2, 1)).astype(jnp.float32)

    inputs = kernel_inputs(params)
    n_in = 1 + len(inputs)

    out_btd = pl.pallas_call(
        audio_model_kernel,
        out_shape=jax.ShapeDtypeStruct((B, T, D), jnp.float32),
        # grid=() : single invocation, whole problem resident in VMEM
        # (no per-step overhead, no double-buffering of invariant weights).
        in_specs=[pl.BlockSpec(memory_space=pltpu.MemorySpace.VMEM) for _ in range(n_in)],
        out_specs=pl.BlockSpec(memory_space=pltpu.MemorySpace.VMEM),
    )(x_btd, *inputs)

    return jnp.transpose(out_btd, (0, 2, 1))                 # back to (B, D, T)


# --------------------------- pure-JAX reference -------------------------------

def reference_forward(x, params):
    B = x.shape[0]
    x = x.reshape(B, MODEL_DIM, N_FRAMES).astype(jnp.float32)
    agg = x.mean(axis=-1)                                     # (B, D)

    def stack(h, hidden, out):
        for w, b in hidden:
            h = h @ w.T + b
            h = jnp.where(h > 0, h, NEG_SLOPE * h)
        w, b = out
        return h @ w.T + b

    room = jax.nn.softmax(stack(agg, params["rooms_hidden"], params["rooms_out"]), axis=-1)
    mix = jax.nn.sigmoid(stack(agg, params["mix_hidden"], params["mix_out"]))[:, :, None]
    imp = room @ params["impulses"]                           # (B, T)
    wet = jnp.zeros_like(x)
    for s in range(N_FRAMES):
        wet = wet.at[:, :, s:].add(imp[:, s][:, None, None] * x[:, :, : N_FRAMES - s])
    return x * mix + wet * (1.0 - mix)


if __name__ == "__main__":
    key = jax.random.PRNGKey(0)
    kp, kx = jax.random.split(key)
    params = make_params(kp)
    x = jax.random.normal(kx, (BATCH, MODEL_DIM, N_FRAMES), jnp.float32)

    out = jax.block_until_ready(audio_model_forward(x, params))
    ref = jax.block_until_ready(reference_forward(x, params))
    np.testing.assert_allclose(np.asarray(out), np.asarray(ref), rtol=1e-4, atol=1e-4)
    print("KERNEL_OK")
</pallas_src>

<mosaic_0001>
module attributes {stable_mosaic.version = 11 : i64} {
  func.func @audio_model_kernel(%arg0: memref<2x16x128xf32, #tpu.memory_space<vmem>>, %arg1: memref<128x256xf32, #tpu.memory_space<vmem>>, %arg2: memref<1x256xf32, #tpu.memory_space<vmem>>, %arg3: memref<2x256x256xf32, #tpu.memory_space<vmem>>, %arg4: memref<2x1x256xf32, #tpu.memory_space<vmem>>, %arg5: memref<256x9xf32, #tpu.memory_space<vmem>>, %arg6: memref<1x9xf32, #tpu.memory_space<vmem>>, %arg7: memref<8x16x16xf32, #tpu.memory_space<vmem>>, %arg8: memref<2x16x128xf32, #tpu.memory_space<vmem>>) attributes {dimension_semantics = [], scalar_prefetch = 0 : i64, scratch_operands = 0 : i64, tpu.core_type = #tpu.core_type<tc>} {
    %c0 = arith.constant 0 : index
    %c0_0 = arith.constant 0 : index
    %c0_1 = arith.constant 0 : index
    %0 = vector.load %arg0[%c0, %c0_0, %c0_1] : memref<2x16x128xf32, #tpu.memory_space<vmem>>, vector<2x16x128xf32>
    %cst = arith.constant dense<0.000000e+00> : vector<2x128xf32>
    %1 = vector.multi_reduction <add>, %0, %cst [1] : vector<2x16x128xf32> to vector<2x128xf32>
    %cst_2 = arith.constant 6.250000e-02 : f32
    %2 = vector.broadcast %cst_2 : f32 to vector<2x128xf32>
    %3 = arith.mulf %1, %2 : vector<2x128xf32>
    %c0_3 = arith.constant 0 : index
    %c0_4 = arith.constant 0 : index
    %4 = vector.load %arg1[%c0_3, %c0_4] : memref<128x256xf32, #tpu.memory_space<vmem>>, vector<128x256xf32>
    %cst_5 = arith.constant dense<0.000000e+00> : vector<2x256xf32>
    %5 = tpu.matmul %3, %4, %cst_5 {dimension_numbers = #tpu.dot_dimension_numbers<[1], [0], [0], [1], [0, 0, 1, 1], [], []>} : vector<2x128xf32>, vector<128x256xf32>, vector<2x256xf32> -> vector<2x256xf32>
    %c0_6 = arith.constant 0 : index
    %c0_7 = arith.constant 0 : index
    %6 = vector.load %arg2[%c0_6, %c0_7] : memref<1x256xf32, #tpu.memory_space<vmem>>, vector<1x256xf32>
    %7 = vector.broadcast %6 : vector<1x256xf32> to vector<2x256xf32>
    %8 = arith.addf %5, %7 : vector<2x256xf32>
    %cst_8 = arith.constant 0.000000e+00 : f32
    %9 = vector.broadcast %cst_8 : f32 to vector<2x256xf32>
    %10 = arith.cmpf ogt, %8, %9 : vector<2x256xf32>
    %cst_9 = arith.constant 2.000000e-01 : f32
    %11 = vector.broadcast %cst_9 : f32 to vector<2x256xf32>
    %12 = arith.mulf %11, %8 : vector<2x256xf32>
    %13 = arith.select %10, %8, %12 : vector<2x256xi1>, vector<2x256xf32>
    %c0_10 = arith.constant 0 : index
    %c0_11 = arith.constant 0 : index
    %c0_12 = arith.constant 0 : index
    %14 = vector.load %arg3[%c0_10, %c0_11, %c0_12] : memref<2x256x256xf32, #tpu.memory_space<vmem>>, vector<1x256x256xf32>
    %15 = vector.shape_cast %14 : vector<1x256x256xf32> to vector<256x256xf32>
    %cst_13 = arith.constant dense<0.000000e+00> : vector<2x256xf32>
    %16 = tpu.matmul %13, %15, %cst_13 {dimension_numbers = #tpu.dot_dimension_numbers<[1], [0], [0], [1], [0, 0, 1, 1], [], []>} : vector<2x256xf32>, vector<256x256xf32>, vector<2x256xf32> -> vector<2x256xf32>
    %c0_14 = arith.constant 0 : index
    %c0_15 = arith.constant 0 : index
    %c0_16 = arith.constant 0 : index
    %17 = vector.load %arg4[%c0_14, %c0_15, %c0_16] : memref<2x1x256xf32, #tpu.memory_space<vmem>>, vector<1x1x256xf32>
    %18 = vector.shape_cast %17 : vector<1x1x256xf32> to vector<1x256xf32>
    %19 = vector.broadcast %18 : vector<1x256xf32> to vector<2x256xf32>
    %20 = arith.addf %16, %19 : vector<2x256xf32>
    %cst_17 = arith.constant 0.000000e+00 : f32
    %21 = vector.broadcast %cst_17 : f32 to vector<2x256xf32>
    %22 = arith.cmpf ogt, %20, %21 : vector<2x256xf32>
    %cst_18 = arith.constant 2.000000e-01 : f32
    %23 = vector.broadcast %cst_18 : f32 to vector<2x256xf32>
    %24 = arith.mulf %23, %20 : vector<2x256xf32>
    %25 = arith.select %22, %20, %24 : vector<2x256xi1>, vector<2x256xf32>
    %c1 = arith.constant 1 : index
    %c0_19 = arith.constant 0 : index
    %c0_20 = arith.constant 0 : index
    %26 = vector.load %arg3[%c1, %c0_19, %c0_20] : memref<2x256x256xf32, #tpu.memory_space<vmem>>, vector<1x256x256xf32>
    %27 = vector.shape_cast %26 : vector<1x256x256xf32> to vector<256x256xf32>
    %cst_21 = arith.constant dense<0.000000e+00> : vector<2x256xf32>
    %28 = tpu.matmul %25, %27, %cst_21 {dimension_numbers = #tpu.dot_dimension_numbers<[1], [0], [0], [1], [0, 0, 1, 1], [], []>} : vector<2x256xf32>, vector<256x256xf32>, vector<2x256xf32> -> vector<2x256xf32>
    %c1_22 = arith.constant 1 : index
    %c0_23 = arith.constant 0 : index
    %c0_24 = arith.constant 0 : index
    %29 = vector.load %arg4[%c1_22, %c0_23, %c0_24] : memref<2x1x256xf32, #tpu.memory_space<vmem>>, vector<1x1x256xf32>
    %30 = vector.shape_cast %29 : vector<1x1x256xf32> to vector<1x256xf32>
    %31 = vector.broadcast %30 : vector<1x256xf32> to vector<2x256xf32>
    %32 = arith.addf %28, %31 : vector<2x256xf32>
    %cst_25 = arith.constant 0.000000e+00 : f32
    %33 = vector.broadcast %cst_25 : f32 to vector<2x256xf32>
    %34 = arith.cmpf ogt, %32, %33 : vector<2x256xf32>
    %cst_26 = arith.constant 2.000000e-01 : f32
    %35 = vector.broadcast %cst_26 : f32 to vector<2x256xf32>
    %36 = arith.mulf %35, %32 : vector<2x256xf32>
    %37 = arith.select %34, %32, %36 : vector<2x256xi1>, vector<2x256xf32>
    %c0_27 = arith.constant 0 : index
    %c0_28 = arith.constant 0 : index
    %38 = vector.load %arg5[%c0_27, %c0_28] : memref<256x9xf32, #tpu.memory_space<vmem>>, vector<256x9xf32>
    %cst_29 = arith.constant dense<0.000000e+00> : vector<2x9xf32>
    %39 = tpu.matmul %37, %38, %cst_29 {dimension_numbers = #tpu.dot_dimension_numbers<[1], [0], [0], [1], [0, 0, 1, 1], [], []>} : vector<2x256xf32>, vector<256x9xf32>, vector<2x9xf32> -> vector<2x9xf32>
    %c0_30 = arith.constant 0 : index
    %c0_31 = arith.constant 0 : index
    %40 = vector.load %arg6[%c0_30, %c0_31] : memref<1x9xf32, #tpu.memory_space<vmem>>, vector<1x9xf32>
    %41 = vector.broadcast %40 : vector<1x9xf32> to vector<2x9xf32>
    %42 = arith.addf %39, %41 : vector<2x9xf32>
    %43 = vector.extract_strided_slice %42 {offsets = [0, 0], sizes = [2, 8], strides = [1, 1]} : vector<2x9xf32> to vector<2x8xf32>
    %44 = vector.extract_strided_slice %42 {offsets = [0, 8], sizes = [2, 1], strides = [1, 1]} : vector<2x9xf32> to vector<2x1xf32>
    %cst_32 = arith.constant dense<0xFF800000> : vector<2xf32>
    %45 = vector.multi_reduction <maximumf>, %43, %cst_32 [1] : vector<2x8xf32> to vector<2xf32>
    %46 = vector.shape_cast %45 : vector<2xf32> to vector<2x1xf32>
    %47 = vector.broadcast %46 : vector<2x1xf32> to vector<2x8xf32>
    %48 = arith.subf %43, %47 : vector<2x8xf32>
    %49 = math.exp %48 : vector<2x8xf32>
    %cst_33 = arith.constant dense<0.000000e+00> : vector<2xf32>
    %50 = vector.multi_reduction <add>, %49, %cst_33 [1] : vector<2x8xf32> to vector<2xf32>
    %51 = vector.shape_cast %50 : vector<2xf32> to vector<2x1xf32>
    %52 = vector.broadcast %51 : vector<2x1xf32> to vector<2x8xf32>
    %53 = arith.divf %49, %52 : vector<2x8xf32>
    %cst_34 = arith.constant 0.000000e+00 : f32
    %54 = vector.broadcast %cst_34 : f32 to vector<2x1xf32>
    %55 = arith.subf %54, %44 : vector<2x1xf32>
    %56 = math.exp %55 : vector<2x1xf32>
    %cst_35 = arith.constant 1.000000e+00 : f32
    %57 = vector.broadcast %cst_35 : f32 to vector<2x1xf32>
    %58 = arith.addf %57, %56 : vector<2x1xf32>
    %cst_36 = arith.constant 1.000000e+00 : f32
    %59 = vector.broadcast %cst_36 : f32 to vector<2x1xf32>
    %60 = arith.divf %59, %58 : vector<2x1xf32>
    %c0_37 = arith.constant 0 : index
    %c0_38 = arith.constant 0 : index
    %c0_39 = arith.constant 0 : index
    %61 = vector.load %arg7[%c0_37, %c0_38, %c0_39] : memref<8x16x16xf32, #tpu.memory_space<vmem>>, vector<8x16x16xf32>
    %cst_40 = arith.constant 0.000000e+00 : f32
    %62 = vector.broadcast %cst_40 : f32 to vector<16x16xf32>
    %63 = vector.extract_strided_slice %53 {offsets = [0, 0], sizes = [1, 1], strides = [1, 1]} : vector<2x8xf32> to vector<1x1xf32>
    %64 = vector.extract_strided_slice %61 {offsets = [0, 0, 0], sizes = [1, 16, 16], strides = [1, 1, 1]} : vector<8x16x16xf32> to vector<1x16x16xf32>
    %65 = vector.shape_cast %64 : vector<1x16x16xf32> to vector<16x16xf32>
    %66 = vector.broadcast %63 : vector<1x1xf32> to vector<16x16xf32>
    %67 = arith.mulf %66, %65 : vector<16x16xf32>
    %68 = arith.addf %62, %67 : vector<16x16xf32>
    %69 = vector.extract_strided_slice %53 {offsets = [0, 1], sizes = [1, 1], strides = [1, 1]} : vector<2x8xf32> to vector<1x1xf32>
    %70 = vector.extract_strided_slice %61 {offsets = [1, 0, 0], sizes = [1, 16, 16], strides = [1, 1, 1]} : vector<8x16x16xf32> to vector<1x16x16xf32>
    %71 = vector.shape_cast %70 : vector<1x16x16xf32> to vector<16x16xf32>
    %72 = vector.broadcast %69 : vector<1x1xf32> to vector<16x16xf32>
    %73 = arith.mulf %72, %71 : vector<16x16xf32>
    %74 = arith.addf %68, %73 : vector<16x16xf32>
    %75 = vector.extract_strided_slice %53 {offsets = [0, 2], sizes = [1, 1], strides = [1, 1]} : vector<2x8xf32> to vector<1x1xf32>
    %76 = vector.extract_strided_slice %61 {offsets = [2, 0, 0], sizes = [1, 16, 16], strides = [1, 1, 1]} : vector<8x16x16xf32> to vector<1x16x16xf32>
    %77 = vector.shape_cast %76 : vector<1x16x16xf32> to vector<16x16xf32>
    %78 = vector.broadcast %75 : vector<1x1xf32> to vector<16x16xf32>
    %79 = arith.mulf %78, %77 : vector<16x16xf32>
    %80 = arith.addf %74, %79 : vector<16x16xf32>
    %81 = vector.extract_strided_slice %53 {offsets = [0, 3], sizes = [1, 1], strides = [1, 1]} : vector<2x8xf32> to vector<1x1xf32>
    %82 = vector.extract_strided_slice %61 {offsets = [3, 0, 0], sizes = [1, 16, 16], strides = [1, 1, 1]} : vector<8x16x16xf32> to vector<1x16x16xf32>
    %83 = vector.shape_cast %82 : vector<1x16x16xf32> to vector<16x16xf32>
    %84 = vector.broadcast %81 : vector<1x1xf32> to vector<16x16xf32>
    %85 = arith.mulf %84, %83 : vector<16x16xf32>
    %86 = arith.addf %80, %85 : vector<16x16xf32>
    %87 = vector.extract_strided_slice %53 {offsets = [0, 4], sizes = [1, 1], strides = [1, 1]} : vector<2x8xf32> to vector<1x1xf32>
    %88 = vector.extract_strided_slice %61 {offsets = [4, 0, 0], sizes = [1, 16, 16], strides = [1, 1, 1]} : vector<8x16x16xf32> to vector<1x16x16xf32>
    %89 = vector.shape_cast %88 : vector<1x16x16xf32> to vector<16x16xf32>
    %90 = vector.broadcast %87 : vector<1x1xf32> to vector<16x16xf32>
    %91 = arith.mulf %90, %89 : vector<16x16xf32>
    %92 = arith.addf %86, %91 : vector<16x16xf32>
    %93 = vector.extract_strided_slice %53 {offsets = [0, 5], sizes = [1, 1], strides = [1, 1]} : vector<2x8xf32> to vector<1x1xf32>
    %94 = vector.extract_strided_slice %61 {offsets = [5, 0, 0], sizes = [1, 16, 16], strides = [1, 1, 1]} : vector<8x16x16xf32> to vector<1x16x16xf32>
    %95 = vector.shape_cast %94 : vector<1x16x16xf32> to vector<16x16xf32>
    %96 = vector.broadcast %93 : vector<1x1xf32> to vector<16x16xf32>
    %97 = arith.mulf %96, %95 : vector<16x16xf32>
    %98 = arith.addf %92, %97 : vector<16x16xf32>
    %99 = vector.extract_strided_slice %53 {offsets = [0, 6], sizes = [1, 1], strides = [1, 1]} : vector<2x8xf32> to vector<1x1xf32>
    %100 = vector.extract_strided_slice %61 {offsets = [6, 0, 0], sizes = [1, 16, 16], strides = [1, 1, 1]} : vector<8x16x16xf32> to vector<1x16x16xf32>
    %101 = vector.shape_cast %100 : vector<1x16x16xf32> to vector<16x16xf32>
    %102 = vector.broadcast %99 : vector<1x1xf32> to vector<16x16xf32>
    %103 = arith.mulf %102, %101 : vector<16x16xf32>
    %104 = arith.addf %98, %103 : vector<16x16xf32>
    %105 = vector.extract_strided_slice %53 {offsets = [0, 7], sizes = [1, 1], strides = [1, 1]} : vector<2x8xf32> to vector<1x1xf32>
    %106 = vector.extract_strided_slice %61 {offsets = [7, 0, 0], sizes = [1, 16, 16], strides = [1, 1, 1]} : vector<8x16x16xf32> to vector<1x16x16xf32>
    %107 = vector.shape_cast %106 : vector<1x16x16xf32> to vector<16x16xf32>
    %108 = vector.broadcast %105 : vector<1x1xf32> to vector<16x16xf32>
    %109 = arith.mulf %108, %107 : vector<16x16xf32>
    %110 = arith.addf %104, %109 : vector<16x16xf32>
    %111 = vector.extract_strided_slice %0 {offsets = [0, 0, 0], sizes = [1, 16, 128], strides = [1, 1, 1]} : vector<2x16x128xf32> to vector<1x16x128xf32>
    %112 = vector.shape_cast %111 : vector<1x16x128xf32> to vector<16x128xf32>
    %cst_41 = arith.constant dense<0.000000e+00> : vector<16x128xf32>
    %113 = tpu.matmul %110, %112, %cst_41 {dimension_numbers = #tpu.dot_dimension_numbers<[1], [0], [0], [1], [0, 0, 1, 1], [], []>} : vector<16x16xf32>, vector<16x128xf32>, vector<16x128xf32> -> vector<16x128xf32>
    %114 = vector.extract_strided_slice %60 {offsets = [0, 0], sizes = [1, 1], strides = [1, 1]} : vector<2x1xf32> to vector<1x1xf32>
    %115 = vector.extract_strided_slice %0 {offsets = [0, 0, 0], sizes = [1, 16, 128], strides = [1, 1, 1]} : vector<2x16x128xf32> to vector<1x16x128xf32>
    %116 = vector.shape_cast %115 : vector<1x16x128xf32> to vector<16x128xf32>
    %117 = vector.broadcast %114 : vector<1x1xf32> to vector<16x128xf32>
    %118 = arith.mulf %116, %117 : vector<16x128xf32>
    %cst_42 = arith.constant 1.000000e+00 : f32
    %119 = vector.broadcast %cst_42 : f32 to vector<1x1xf32>
    %120 = arith.subf %119, %114 : vector<1x1xf32>
    %121 = vector.broadcast %120 : vector<1x1xf32> to vector<16x128xf32>
    %122 = arith.mulf %113, %121 : vector<16x128xf32>
    %123 = arith.addf %118, %122 : vector<16x128xf32>
    %c0_43 = arith.constant 0 : index
    %c0_44 = arith.constant 0 : index
    %c0_45 = arith.constant 0 : index
    %124 = vector.load %arg8[%c0_43, %c0_44, %c0_45] : memref<2x16x128xf32, #tpu.memory_space<vmem>>, vector<1x16x128xf32>
    %125 = vector.shape_cast %124 : vector<1x16x128xf32> to vector<16x128xf32>
    %126 = vector.shape_cast %123 : vector<16x128xf32> to vector<1x16x128xf32>
    tpu.vector_store %arg8[%c0_43, %c0_44, %c0_45], %126 {strides = array<i32>} : memref<2x16x128xf32, #tpu.memory_space<vmem>>, vector<1x16x128xf32>,
    %cst_46 = arith.constant 0.000000e+00 : f32
    %127 = vector.broadcast %cst_46 : f32 to vector<16x16xf32>
    %128 = vector.extract_strided_slice %53 {offsets = [1, 0], sizes = [1, 1], strides = [1, 1]} : vector<2x8xf32> to vector<1x1xf32>
    %129 = vector.extract_strided_slice %61 {offsets = [0, 0, 0], sizes = [1, 16, 16], strides = [1, 1, 1]} : vector<8x16x16xf32> to vector<1x16x16xf32>
    %130 = vector.shape_cast %129 : vector<1x16x16xf32> to vector<16x16xf32>
    %131 = vector.broadcast %128 : vector<1x1xf32> to vector<16x16xf32>
    %132 = arith.mulf %131, %130 : vector<16x16xf32>
    %133 = arith.addf %127, %132 : vector<16x16xf32>
    %134 = vector.extract_strided_slice %53 {offsets = [1, 1], sizes = [1, 1], strides = [1, 1]} : vector<2x8xf32> to vector<1x1xf32>
    %135 = vector.extract_strided_slice %61 {offsets = [1, 0, 0], sizes = [1, 16, 16], strides = [1, 1, 1]} : vector<8x16x16xf32> to vector<1x16x16xf32>
    %136 = vector.shape_cast %135 : vector<1x16x16xf32> to vector<16x16xf32>
    %137 = vector.broadcast %134 : vector<1x1xf32> to vector<16x16xf32>
    %138 = arith.mulf %137, %136 : vector<16x16xf32>
    %139 = arith.addf %133, %138 : vector<16x16xf32>
    %140 = vector.extract_strided_slice %53 {offsets = [1, 2], sizes = [1, 1], strides = [1, 1]} : vector<2x8xf32> to vector<1x1xf32>
    %141 = vector.extract_strided_slice %61 {offsets = [2, 0, 0], sizes = [1, 16, 16], strides = [1, 1, 1]} : vector<8x16x16xf32> to vector<1x16x16xf32>
    %142 = vector.shape_cast %141 : vector<1x16x16xf32> to vector<16x16xf32>
    %143 = vector.broadcast %140 : vector<1x1xf32> to vector<16x16xf32>
    %144 = arith.mulf %143, %142 : vector<16x16xf32>
    %145 = arith.addf %139, %144 : vector<16x16xf32>
    %146 = vector.extract_strided_slice %53 {offsets = [1, 3], sizes = [1, 1], strides = [1, 1]} : vector<2x8xf32> to vector<1x1xf32>
    %147 = vector.extract_strided_slice %61 {offsets = [3, 0, 0], sizes = [1, 16, 16], strides = [1, 1, 1]} : vector<8x16x16xf32> to vector<1x16x16xf32>
    %148 = vector.shape_cast %147 : vector<1x16x16xf32> to vector<16x16xf32>
    %149 = vector.broadcast %146 : vector<1x1xf32> to vector<16x16xf32>
    %150 = arith.mulf %149, %148 : vector<16x16xf32>
    %151 = arith.addf %145, %150 : vector<16x16xf32>
    %152 = vector.extract_strided_slice %53 {offsets = [1, 4], sizes = [1, 1], strides = [1, 1]} : vector<2x8xf32> to vector<1x1xf32>
    %153 = vector.extract_strided_slice %61 {offsets = [4, 0, 0], sizes = [1, 16, 16], strides = [1, 1, 1]} : vector<8x16x16xf32> to vector<1x16x16xf32>
    %154 = vector.shape_cast %153 : vector<1x16x16xf32> to vector<16x16xf32>
    %155 = vector.broadcast %152 : vector<1x1xf32> to vector<16x16xf32>
    %156 = arith.mulf %155, %154 : vector<16x16xf32>
    %157 = arith.addf %151, %156 : vector<16x16xf32>
    %158 = vector.extract_strided_slice %53 {offsets = [1, 5], sizes = [1, 1], strides = [1, 1]} : vector<2x8xf32> to vector<1x1xf32>
    %159 = vector.extract_strided_slice %61 {offsets = [5, 0, 0], sizes = [1, 16, 16], strides = [1, 1, 1]} : vector<8x16x16xf32> to vector<1x16x16xf32>
    %160 = vector.shape_cast %159 : vector<1x16x16xf32> to vector<16x16xf32>
    %161 = vector.broadcast %158 : vector<1x1xf32> to vector<16x16xf32>
    %162 = arith.mulf %161, %160 : vector<16x16xf32>
    %163 = arith.addf %157, %162 : vector<16x16xf32>
    %164 = vector.extract_strided_slice %53 {offsets = [1, 6], sizes = [1, 1], strides = [1, 1]} : vector<2x8xf32> to vector<1x1xf32>
    %165 = vector.extract_strided_slice %61 {offsets = [6, 0, 0], sizes = [1, 16, 16], strides = [1, 1, 1]} : vector<8x16x16xf32> to vector<1x16x16xf32>
    %166 = vector.shape_cast %165 : vector<1x16x16xf32> to vector<16x16xf32>
    %167 = vector.broadcast %164 : vector<1x1xf32> to vector<16x16xf32>
    %168 = arith.mulf %167, %166 : vector<16x16xf32>
    %169 = arith.addf %163, %168 : vector<16x16xf32>
    %170 = vector.extract_strided_slice %53 {offsets = [1, 7], sizes = [1, 1], strides = [1, 1]} : vector<2x8xf32> to vector<1x1xf32>
    %171 = vector.extract_strided_slice %61 {offsets = [7, 0, 0], sizes = [1, 16, 16], strides = [1, 1, 1]} : vector<8x16x16xf32> to vector<1x16x16xf32>
    %172 = vector.shape_cast %171 : vector<1x16x16xf32> to vector<16x16xf32>
    %173 = vector.broadcast %170 : vector<1x1xf32> to vector<16x16xf32>
    %174 = arith.mulf %173, %172 : vector<16x16xf32>
    %175 = arith.addf %169, %174 : vector<16x16xf32>
    %176 = vector.extract_strided_slice %0 {offsets = [1, 0, 0], sizes = [1, 16, 128], strides = [1, 1, 1]} : vector<2x16x128xf32> to vector<1x16x128xf32>
    %177 = vector.shape_cast %176 : vector<1x16x128xf32> to vector<16x128xf32>
    %cst_47 = arith.constant dense<0.000000e+00> : vector<16x128xf32>
    %178 = tpu.matmul %175, %177, %cst_47 {dimension_numbers = #tpu.dot_dimension_numbers<[1], [0], [0], [1], [0, 0, 1, 1], [], []>} : vector<16x16xf32>, vector<16x128xf32>, vector<16x128xf32> -> vector<16x128xf32>
    %179 = vector.extract_strided_slice %60 {offsets = [1, 0], sizes = [1, 1], strides = [1, 1]} : vector<2x1xf32> to vector<1x1xf32>
    %180 = vector.extract_strided_slice %0 {offsets = [1, 0, 0], sizes = [1, 16, 128], strides = [1, 1, 1]} : vector<2x16x128xf32> to vector<1x16x128xf32>
    %181 = vector.shape_cast %180 : vector<1x16x128xf32> to vector<16x128xf32>
    %182 = vector.broadcast %179 : vector<1x1xf32> to vector<16x128xf32>
    %183 = arith.mulf %181, %182 : vector<16x128xf32>
    %cst_48 = arith.constant 1.000000e+00 : f32
    %184 = vector.broadcast %cst_48 : f32 to vector<1x1xf32>
    %185 = arith.subf %184, %179 : vector<1x1xf32>
    %186 = vector.broadcast %185 : vector<1x1xf32> to vector<16x128xf32>
    %187 = arith.mulf %178, %186 : vector<16x128xf32>
    %188 = arith.addf %183, %187 : vector<16x128xf32>
    %c1_49 = arith.constant 1 : index
    %c0_50 = arith.constant 0 : index
    %c0_51 = arith.constant 0 : index
    %189 = vector.load %arg8[%c1_49, %c0_50, %c0_51] : memref<2x16x128xf32, #tpu.memory_space<vmem>>, vector<1x16x128xf32>
    %190 = vector.shape_cast %189 : vector<1x16x128xf32> to vector<16x128xf32>
    %191 = vector.shape_cast %188 : vector<16x128xf32> to vector<1x16x128xf32>
    tpu.vector_store %arg8[%c1_49, %c0_50, %c0_51], %191 {strides = array<i32>} : memref<2x16x128xf32, #tpu.memory_space<vmem>>, vector<1x16x128xf32>,
    return
  }
}

</mosaic_0001>

<llo_original>
// kernel: tpu_custom_call.1
$region0: #{tpu_custom_call.1}
  #allocation0 [shape = 'u32[]', space=smem, size = 0x4, offset = 0x4, fixed_abs, tag = 'smem constant byte address 0x4 - core index']
  #allocation1 [shape = 'u32[144,128]{1,0:T(1,128)}', space=vmem, size = 0x12000, scoped, tag = 'internal scratch']
  %s0 = inlined_call_operand.vmem [shape: f32[2,16,128], index: 0, kind: input, shape index: {}]
  %s1 = inlined_call_operand.vmem [shape: f32[128,256], index: 1, kind: input, shape index: {}]
  %s2 = inlined_call_operand.vmem [shape: f32[1,256], index: 2, kind: input, shape index: {}]
  %s3 = inlined_call_operand.hbm [shape: f32[2,256,256], index: 3, kind: input, shape index: {}]
  %s4 = inlined_call_operand.vmem [shape: f32[2,1,256], index: 4, kind: input, shape index: {}]
  %s5 = inlined_call_operand.vmem [shape: f32[256,9], index: 5, kind: input, shape index: {}]
  %s6 = inlined_call_operand.vmem [shape: f32[1,9], index: 6, kind: input, shape index: {}]
  %s7 = inlined_call_operand.hbm [shape: f32[8,16,16], index: 7, kind: input, shape index: {}]
  %s8 = inlined_call_operand.hbm [shape: f32[2,16,128], index: 8, kind: output, shape index: {}]
  %s9 = sld [smem:[#allocation0]]
  $region50: #{tpu_custom_call.1} parent=0
    _
  %s11 = ssub.s32 1, %s9
  %s12 = scalar_select 0, %s11, %s9
  $region1: #{tpu_custom_call.1} parent=0
    #allocation2 [shape = 'u8[524288]{0}', space=vmem, size = 0x80000, scoped, tag = 'input window, operand 3, single buffered']
    #allocation3 [shape = 's32[1]{0}', space=sflag, size = 0x4, scoped, tag = 'scoped memory for tpu_custom_call.1']
    #allocation4 [shape = 's32[1]{0}', space=sflag, size = 0x4, scoped, tag = 'scoped memory for tpu_custom_call.1']
    #allocation5 [shape = 'u8[65536]{0}', space=vmem, size = 0x10000, scoped, tag = 'input window, operand 7, single buffered']
    #allocation6 [shape = 's32[1]{0}', space=sflag, size = 0x4, scoped, tag = 'scoped memory for tpu_custom_call.1']
    #allocation7 [shape = 'u8[16384]{0}', space=vmem, size = 0x4000, scoped, tag = 'output window, operand 0, single buffered']
    %13 = vsyncpa [#allocation3], 0
    %14 = vsyncpa [#allocation6], 0
    %15 = vsyncpa [#allocation4], 0
    // Predicated region
    $region2: #{tpu_custom_call.1} parent=1 // pred_check
      _
    $region3: #{tpu_custom_call.1} parent=1 // pred_check_branch
      %17 = sbr.rel (0) target = $region5
    $region4: #{tpu_custom_call.1} parent=1 // pred_region
      _
    $region5: #{tpu_custom_call.1} parent=1 // pred_fallthru
      _
    // Predicated region
    $region6: #{tpu_custom_call.1} parent=1 // pred_check
      _
    $region7: #{tpu_custom_call.1} parent=1 // pred_check_branch
      %19 = sbr.rel (0) target = $region9
    $region8: #{tpu_custom_call.1} parent=1 // pred_region
      _
    $region9: #{tpu_custom_call.1} parent=1 // pred_fallthru
      _
    // Predicated region
    $region10: #{tpu_custom_call.1} parent=1 // pred_check
      _
    $region11: #{tpu_custom_call.1} parent=1 // pred_check_branch
      %21 = sbr.rel (0) target = $region13
    $region12: #{tpu_custom_call.1} parent=1 // pred_region
      _
    $region13: #{tpu_custom_call.1} parent=1 // pred_fallthru
      _
    // Predicated region
    $region14: #{tpu_custom_call.1} parent=1 // pred_check
      _
    $region15: #{tpu_custom_call.1} parent=1 // pred_check_branch
      %23 = sbr.rel (0) target = $region17
    $region16: #{tpu_custom_call.1} parent=1 // pred_region
      %s25 = ssub.s32 16384, 16384
      %26 = vsyncadd [#allocation3], %s25
      %s27 = sshll.u32 [#allocation2], 4
      %s28 = int_to_ptr.vmem [resolvable:$true] %s27
      %33 = dma.hbm_to_vmem [thread:$0]  %s3, 16384, %s28, [#allocation3], 256, 256, 16
    $region17: #{tpu_custom_call.1} parent=1 // pred_fallthru
      _
    // Predicated region
    $region18: #{tpu_custom_call.1} parent=1 // pred_check
      _
    $region19: #{tpu_custom_call.1} parent=1 // pred_check_branch
      %35 = sbr.rel (0) target = $region21
    $region20: #{tpu_custom_call.1} parent=1 // pred_region
      _
    $region21: #{tpu_custom_call.1} parent=1 // pred_fallthru
      _
    // Predicated region
    $region22: #{tpu_custom_call.1} parent=1 // pred_check
      _
    $region23: #{tpu_custom_call.1} parent=1 // pred_check_branch
      %37 = sbr.rel (0) target = $region25
    $region24: #{tpu_custom_call.1} parent=1 // pred_region
      _
    $region25: #{tpu_custom_call.1} parent=1 // pred_fallthru
      _
    // Predicated region
    $region26: #{tpu_custom_call.1} parent=1 // pred_check
      _
    $region27: #{tpu_custom_call.1} parent=1 // pred_check_branch
      %39 = sbr.rel (0) target = $region29
    $region28: #{tpu_custom_call.1} parent=1 // pred_region
      _
    $region29: #{tpu_custom_call.1} parent=1 // pred_fallthru
      _
    // Predicated region
    $region30: #{tpu_custom_call.1} parent=1 // pred_check
      _
    $region31: #{tpu_custom_call.1} parent=1 // pred_check_branch
      %41 = sbr.rel (0) target = $region33
    $region32: #{tpu_custom_call.1} parent=1 // pred_region
      %s43 = ssub.s32 2048, 2048
      %44 = vsyncadd [#allocation6], %s43
      %s45 = sshll.u32 [#allocation5], 4
      %s46 = int_to_ptr.vmem [resolvable:$true] %s45
      %51 = dma.hbm_to_vmem [thread:$0]  %s7, 2048, %s46, [#allocation6], 128, 128, 8
    $region33: #{tpu_custom_call.1} parent=1 // pred_fallthru
      _
    // Predicated region
    $region34: #{tpu_custom_call.1} parent=1 // pred_check
      _
    $region35: #{tpu_custom_call.1} parent=1 // pred_check_branch
      %53 = sbr.rel (0) target = $region37
    $region36: #{tpu_custom_call.1} parent=1 // pred_region
      %54 = dma.done [#allocation3], 16384
    $region37: #{tpu_custom_call.1} parent=1 // pred_fallthru
      _
    // Predicated region
    $region38: #{tpu_custom_call.1} parent=1 // pred_check
      _
    $region39: #{tpu_custom_call.1} parent=1 // pred_check_branch
      %56 = sbr.rel (0) target = $region41
    $region40: #{tpu_custom_call.1} parent=1 // pred_region
      %57 = dma.done [#allocation6], 2048
    $region41: #{tpu_custom_call.1} parent=1 // pred_fallthru
      _
    %v58 = vld [vmem:[%s0] sm:$0xff]
    %v59 = vld [vmem:[%s0 + $0x8] sm:$0xff]
    %v60 = vld [vmem:[%s0 + $0x10] sm:$0xff]
    %v61 = vld [vmem:[%s0 + $0x18] sm:$0xff]
    %v62 = vadd.f32 %v58, %v59
    %v63 = vrot.slane %v62, 4
    %v64 = vadd.f32 %v62, %v63
    %v65 = vrot.slane %v64, 2
    %v66 = vadd.f32 %v64, %v65
    %v67 = vrot.slane %v66, 1
    %v68 = vadd.f32 %v66, %v67
    %v69 = vadd.f32 %v60, %v61
    %v70 = vrot.slane %v69, 4
    %v71 = vadd.f32 %v69, %v70
    %v72 = vrot.slane %v71, 2
    %v73 = vadd.f32 %v71, %v72
    %v74 = vrot.slane %v73, 1
    %v75 = vadd.f32 %v73, %v74
    %v76 = vmul.f32 %v68, 0.0625
    %v77 = vmul.f32 %v75, 0.0625
    %v78 = vld [vmem:[%s1] sm:$0xff]
    %v79 = vld [vmem:[%s1 + $0x8] sm:$0xff]
    %v80 = vld [vmem:[%s1 + $0x10] sm:$0xff]
    %v81 = vld [vmem:[%s1 + $0x18] sm:$0xff]
    %v82 = vld [vmem:[%s1 + $0x20] sm:$0xff]
    %v83 = vld [vmem:[%s1 + $0x28] sm:$0xff]
    %v84 = vld [vmem:[%s1 + $0x30] sm:$0xff]
    %v85 = vld [vmem:[%s1 + $0x38] sm:$0xff]
    %v86 = vld [vmem:[%s1 + $0x40] sm:$0xff]
    %v87 = vld [vmem:[%s1 + $0x48] sm:$0xff]
    %v88 = vld [vmem:[%s1 + $0x50] sm:$0xff]
    %v89 = vld [vmem:[%s1 + $0x58] sm:$0xff]
    %v90 = vld [vmem:[%s1 + $0x60] sm:$0xff]
    %v91 = vld [vmem:[%s1 + $0x68] sm:$0xff]
    %v92 = vld [vmem:[%s1 + $0x70] sm:$0xff]
    %v93 = vld [vmem:[%s1 + $0x78] sm:$0xff]
    %v94 = vld [vmem:[%s1 + $0x80] sm:$0xff]
    %v95 = vld [vmem:[%s1 + $0x88] sm:$0xff]
    %v96 = vld [vmem:[%s1 + $0x90] sm:$0xff]
    %v97 = vld [vmem:[%s1 + $0x98] sm:$0xff]
    %v98 = vld [vmem:[%s1 + $0xa0] sm:$0xff]
    %v99 = vld [vmem:[%s1 + $0xa8] sm:$0xff]
    %v100 = vld [vmem:[%s1 + $0xb0] sm:$0xff]
    %v101 = vld [vmem:[%s1 + $0xb8] sm:$0xff]
    %v102 = vld [vmem:[%s1 + $0xc0] sm:$0xff]
    %v103 = vld [vmem:[%s1 + $0xc8] sm:$0xff]
    %v104 = vld [vmem:[%s1 + $0xd0] sm:$0xff]
    %v105 = vld [vmem:[%s1 + $0xd8] sm:$0xff]
    %v106 = vld [vmem:[%s1 + $0xe0] sm:$0xff]
    %v107 = vld [vmem:[%s1 + $0xe8] sm:$0xff]
    %v108 = vld [vmem:[%s1 + $0xf0] sm:$0xff]
    %v109 = vld [vmem:[%s1 + $0xf8] sm:$0xff]
    %v110 = vld [vmem:[%s2] sm:$0x3]
    %v112 = vlaneseq
    %v113 = vshrl.u32 %v112, 7
    %v114 = vsub.s32 0, %v113
    %v115 = vrot.slane %v110, %v114
    %v116 = vlaneseq
    %v117 = vshrl.u32 %v116, 7
    %v118 = vsub.s32 1, %v117
    %v119 = vrot.slane %v110, %v118
    %vm124 = vcmask 1041409
    %v125 = vsel %vm124, %v77, %v76
    %127 = vmatprep.subr.mxu0 %v109
    %128 = vmatpush1.msra.mxu0 %v108
    %129 = vmatprep.subr.mxu0 %v107
    %130 = vmatpush1.msra.mxu0 %v106
    %131 = vmatprep.subr.mxu0 %v105
    %132 = vmatpush1.msra.mxu0 %v104
    %133 = vmatprep.subr.mxu0 %v103
    %134 = vmatpush1.msra.mxu0 %v102
    %135 = vmatprep.subr.mxu0 %v101
    %136 = vmatpush1.msra.mxu0 %v100
    %137 = vmatprep.subr.mxu0 %v99
    %138 = vmatpush1.msra.mxu0 %v98
    %139 = vmatprep.subr.mxu0 %v97
    %140 = vmatpush1.msra.mxu0 %v96
    %141 = vmatprep.subr.mxu0 %v95
    %142 = vmatpush1.msra.mxu0 %v94
    %143 = vmatprep.subr.mxu0 %v93
    %144 = vmatpush1.msra.mxu0 %v92
    %145 = vmatprep.subr.mxu0 %v91
    %146 = vmatpush1.msra.mxu0 %v90
    %147 = vmatprep.subr.mxu0 %v89
    %148 = vmatpush1.msra.mxu0 %v88
    %149 = vmatprep.subr.mxu0 %v87
    %150 = vmatpush1.msra.mxu0 %v86
    %151 = vmatprep.subr.mxu0 %v85
    %152 = vmatpush1.msra.mxu0 %v84
    %153 = vmatprep.subr.mxu0 %v83
    %154 = vmatpush1.msra.mxu0 %v82
    %155 = vmatprep.subr.mxu0 %v81
    %156 = vmatpush1.msra.mxu0 %v80
    %157 = vmatprep.subr.mxu0 %v79
    %158 = vmatpush1.msra.mxu0 %v78
    %159 = vmatprep.subr.mxu0 0.0
    %160 = vmatpush2.msra.mxu0 0.0
    %161 = vmatprep.subr.mxu0 0.0
    %162 = vmatpush2.msra.mxu0 0.0
    %163 = vmatprep.subr.mxu0 0.0
    %164 = vmatpush2.msra.mxu0 0.0
    %165 = vmatprep.subr.mxu0 0.0
    %166 = vmatpush2.msra.mxu0 0.0
    %167 = vmatprep.subr.mxu0 0.0
    %168 = vmatpush2.msra.mxu0 0.0
    %169 = vmatprep.subr.mxu0 0.0
    %170 = vmatpush2.msra.mxu0 0.0
    %171 = vmatprep.subr.mxu0 0.0
    %172 = vmatpush2.msra.mxu0 0.0
    %173 = vmatprep.subr.mxu0 0.0
    %174 = vmatpush2.msra.mxu0 0.0
    %175 = vmatprep.subr.mxu0 0.0
    %176 = vmatpush2.msra.mxu0 0.0
    %177 = vmatprep.subr.mxu0 0.0
    %178 = vmatpush2.msra.mxu0 0.0
    %179 = vmatprep.subr.mxu0 0.0
    %180 = vmatpush2.msra.mxu0 0.0
    %181 = vmatprep.subr.mxu0 0.0
    %182 = vmatpush2.msra.mxu0 0.0
    %183 = vmatprep.subr.mxu0 0.0
    %184 = vmatpush2.msra.mxu0 0.0
    %185 = vmatprep.subr.mxu0 0.0
    %186 = vmatpush2.msra.mxu0 0.0
    %187 = vmatprep.subr.mxu0 0.0
    %188 = vmatpush2.msra.mxu0 0.0
    %189 = vmatprep.subr.mxu0 0.0
    %190 = vmatpush2.msra.mxu0 0.0
    %191 = vmatprep.mubr.f32.mxu0 0.0
    %192 = vmatmul.mubr.f32.gmra.mxu0 %v125
    %v193 = vpop.f32.mrf.mxu0
    %v194 = vadd.f32 %v115, %v193
    %v195 = vpop.f32.mrf.mxu0
    %v196 = vadd.f32 %v119, %v195
    %197 = vdwg.mxu0
    %vm198 = vcmp.gt.f32.partialorder %v194, 0.0
    %vm199 = vcmp.gt.f32.partialorder %v196, 0.0
    %v200 = vmul.f32 %v194, 0.2
    %v201 = vmul.f32 %v196, 0.2
    %v202 = vsel %vm198, %v194, %v200
    %v203 = vsel %vm199, %v196, %v201
    %v204 = vld [vmem:[#allocation2] sm:$0xff]
    %v205 = vld [vmem:[#allocation2 + $0x8] sm:$0xff]
    %v206 = vld [vmem:[#allocation2 + $0x10] sm:$0xff]
    %v207 = vld [vmem:[#allocation2 + $0x18] sm:$0xff]
    %v208 = vld [vmem:[#allocation2 + $0x20] sm:$0xff]
    %v209 = vld [vmem:[#allocation2 + $0x28] sm:$0xff]
    %v210 = vld [vmem:[#allocation2 + $0x30] sm:$0xff]
    %v211 = vld [vmem:[#allocation2 + $0x38] sm:$0xff]
    %v212 = vld [vmem:[#allocation2 + $0x40] sm:$0xff]
    %v213 = vld [vmem:[#allocation2 + $0x48] sm:$0xff]
    %v214 = vld [vmem:[#allocation2 + $0x50] sm:$0xff]
    %v215 = vld [vmem:[#allocation2 + $0x58] sm:$0xff]
    %v216 = vld [vmem:[#allocation2 + $0x60] sm:$0xff]
    %v217 = vld [vmem:[#allocation2 + $0x68] sm:$0xff]
    %v218 = vld [vmem:[#allocation2 + $0x70] sm:$0xff]
    %v219 = vld [vmem:[#allocation2 + $0x78] sm:$0xff]
    %v220 = vld [vmem:[#allocation2 + $0x80] sm:$0xff]
    %v221 = vld [vmem:[#allocation2 + $0x88] sm:$0xff]
    %v222 = vld [vmem:[#allocation2 + $0x90] sm:$0xff]
    %v223 = vld [vmem:[#allocation2 + $0x98] sm:$0xff]
    %v224 = vld [vmem:[#allocation2 + $0xa0] sm:$0xff]
    %v225 = vld [vmem:[#allocation2 + $0xa8] sm:$0xff]
    %v226 = vld [vmem:[#allocation2 + $0xb0] sm:$0xff]
    %v227 = vld [vmem:[#allocation2 + $0xb8] sm:$0xff]
    %v228 = vld [vmem:[#allocation2 + $0xc0] sm:$0xff]
    %v229 = vld [vmem:[#allocation2 + $0xc8] sm:$0xff]
    %v230 = vld [vmem:[#allocation2 + $0xd0] sm:$0xff]
    %v231 = vld [vmem:[#allocation2 + $0xd8] sm:$0xff]
    %v232 = vld [vmem:[#allocation2 + $0xe0] sm:$0xff]
    %v233 = vld [vmem:[#allocation2 + $0xe8] sm:$0xff]
    %v234 = vld [vmem:[#allocation2 + $0xf0] sm:$0xff]
    %v235 = vld [vmem:[#allocation2 + $0xf8] sm:$0xff]
    %v236 = vld [vmem:[#allocation2 + $0x100] sm:$0xff]
    %v237 = vld [vmem:[#allocation2 + $0x108] sm:$0xff]
    %v238 = vld [vmem:[#allocation2 + $0x110] sm:$0xff]
    %v239 = vld [vmem:[#allocation2 + $0x118] sm:$0xff]
    %v240 = vld [vmem:[#allocation2 + $0x120] sm:$0xff]
    %v241 = vld [vmem:[#allocation2 + $0x128] sm:$0xff]
    %v242 = vld [vmem:[#allocation2 + $0x130] sm:$0xff]
    %v243 = vld [vmem:[#allocation2 + $0x138] sm:$0xff]
    %v244 = vld [vmem:[#allocation2 + $0x140] sm:$0xff]
    %v245 = vld [vmem:[#allocation2 + $0x148] sm:$0xff]
    %v246 = vld [vmem:[#allocation2 + $0x150] sm:$0xff]
    %v247 = vld [vmem:[#allocation2 + $0x158] sm:$0xff]
    %v248 = vld [vmem:[#allocation2 + $0x160] sm:$0xff]
    %v249 = vld [vmem:[#allocation2 + $0x168] sm:$0xff]
    %v250 = vld [vmem:[#allocation2 + $0x170] sm:$0xff]
    %v251 = vld [vmem:[#allocation2 + $0x178] sm:$0xff]
    %v252 = vld [vmem:[#allocation2 + $0x180] sm:$0xff]
    %v253 = vld [vmem:[#allocation2 + $0x188] sm:$0xff]
    %v254 = vld [vmem:[#allocation2 + $0x190] sm:$0xff]
    %v255 = vld [vmem:[#allocation2 + $0x198] sm:$0xff]
    %v256 = vld [vmem:[#allocation2 + $0x1a0] sm:$0xff]
    %v257 = vld [vmem:[#allocation2 + $0x1a8] sm:$0xff]
    %v258 = vld [vmem:[#allocation2 + $0x1b0] sm:$0xff]
    %v259 = vld [vmem:[#allocation2 + $0x1b8] sm:$0xff]
    %v260 = vld [vmem:[#allocation2 + $0x1c0] sm:$0xff]
    %v261 = vld [vmem:[#allocation2 + $0x1c8] sm:$0xff]
    %v262 = vld [vmem:[#allocation2 + $0x1d0] sm:$0xff]
    %v263 = vld [vmem:[#allocation2 + $0x1d8] sm:$0xff]
    %v264 = vld [vmem:[#allocation2 + $0x1e0] sm:$0xff]
    %v265 = vld [vmem:[#allocation2 + $0x1e8] sm:$0xff]
    %v266 = vld [vmem:[#allocation2 + $0x1f0] sm:$0xff]
    %v267 = vld [vmem:[#allocation2 + $0x1f8] sm:$0xff]
    %v268 = vld [vmem:[%s4] sm:$0x3]
    %v270 = vlaneseq
    %v271 = vshrl.u32 %v270, 7
    %v272 = vsub.s32 0, %v271
    %v273 = vrot.slane %v268, %v272
    %v274 = vlaneseq
    %v275 = vshrl.u32 %v274, 7
    %v276 = vsub.s32 1, %v275
    %v277 = vrot.slane %v268, %v276
    %280 = vmatprep.subr.mxu0 %v235
    %281 = vmatpush1.msra.mxu0 %v234
    %282 = vmatprep.subr.mxu0 %v233
    %283 = vmatpush1.msra.mxu0 %v232
    %284 = vmatprep.subr.mxu0 %v231
    %285 = vmatpush1.msra.mxu0 %v230
    %286 = vmatprep.subr.mxu0 %v229
    %287 = vmatpush1.msra.mxu0 %v228
    %288 = vmatprep.subr.mxu0 %v227
    %289 = vmatpush1.msra.mxu0 %v226
    %290 = vmatprep.subr.mxu0 %v225
    %291 = vmatpush1.msra.mxu0 %v224
    %292 = vmatprep.subr.mxu0 %v223
    %293 = vmatpush1.msra.mxu0 %v222
    %294 = vmatprep.subr.mxu0 %v221
    %295 = vmatpush1.msra.mxu0 %v220
    %296 = vmatprep.subr.mxu0 %v219
    %297 = vmatpush1.msra.mxu0 %v218
    %298 = vmatprep.subr.mxu0 %v217
    %299 = vmatpush1.msra.mxu0 %v216
    %300 = vmatprep.subr.mxu0 %v215
    %301 = vmatpush1.msra.mxu0 %v214
    %302 = vmatprep.subr.mxu0 %v213
    %303 = vmatpush1.msra.mxu0 %v212
    %304 = vmatprep.subr.mxu0 %v211
    %305 = vmatpush1.msra.mxu0 %v210
    %306 = vmatprep.subr.mxu0 %v209
    %307 = vmatpush1.msra.mxu0 %v208
    %308 = vmatprep.subr.mxu0 %v207
    %309 = vmatpush1.msra.mxu0 %v206
    %310 = vmatprep.subr.mxu0 %v205
    %311 = vmatpush1.msra.mxu0 %v204
    %312 = vmatprep.subr.mxu0 %v267
    %313 = vmatpush2.msra.mxu0 %v266
    %314 = vmatprep.subr.mxu0 %v265
    %315 = vmatpush2.msra.mxu0 %v264
    %316 = vmatprep.subr.mxu0 %v263
    %317 = vmatpush2.msra.mxu0 %v262
    %318 = vmatprep.subr.mxu0 %v261
    %319 = vmatpush2.msra.mxu0 %v260
    %320 = vmatprep.subr.mxu0 %v259
    %321 = vmatpush2.msra.mxu0 %v258
    %322 = vmatprep.subr.mxu0 %v257
    %323 = vmatpush2.msra.mxu0 %v256
    %324 = vmatprep.subr.mxu0 %v255
    %325 = vmatpush2.msra.mxu0 %v254
    %326 = vmatprep.subr.mxu0 %v253
    %327 = vmatpush2.msra.mxu0 %v252
    %328 = vmatprep.subr.mxu0 %v251
    %329 = vmatpush2.msra.mxu0 %v250
    %330 = vmatprep.subr.mxu0 %v249
    %331 = vmatpush2.msra.mxu0 %v248
    %332 = vmatprep.subr.mxu0 %v247
    %333 = vmatpush2.msra.mxu0 %v246
    %334 = vmatprep.subr.mxu0 %v245
    %335 = vmatpush2.msra.mxu0 %v244
    %336 = vmatprep.subr.mxu0 %v243
    %337 = vmatpush2.msra.mxu0 %v242
    %338 = vmatprep.subr.mxu0 %v241
    %339 = vmatpush2.msra.mxu0 %v240
    %340 = vmatprep.subr.mxu0 %v239
    %341 = vmatpush2.msra.mxu0 %v238
    %342 = vmatprep.subr.mxu0 %v237
    %343 = vmatpush2.msra.mxu0 %v236
    %344 = vmatprep.mubr.f32.mxu0 %v203
    %345 = vmatmul.mubr.f32.gmra.mxu0 %v202
    %v346 = vpop.f32.mrf.mxu0
    %v347 = vadd.f32 %v273, %v346
    %v348 = vpop.f32.mrf.mxu0
    %v349 = vadd.f32 %v277, %v348
    %350 = vdwg.mxu0
    %vm351 = vcmp.gt.f32.partialorder %v347, 0.0
    %vm352 = vcmp.gt.f32.partialorder %v349, 0.0
    %v353 = vmul.f32 %v347, 0.2
    %v354 = vmul.f32 %v349, 0.2
    %v355 = vsel %vm351, %v347, %v353
    %v356 = vsel %vm352, %v349, %v354
    %s357 = scalar_lea.vmem [#allocation2], 512
    %v358 = vld [vmem:[%s357] sm:$0xff]
    %v359 = vld [vmem:[%s357 + $0x8] sm:$0xff]
    %v360 = vld [vmem:[%s357 + $0x10] sm:$0xff]
    %v361 = vld [vmem:[%s357 + $0x18] sm:$0xff]
    %v362 = vld [vmem:[%s357 + $0x20] sm:$0xff]
    %v363 = vld [vmem:[%s357 + $0x28] sm:$0xff]
    %v364 = vld [vmem:[%s357 + $0x30] sm:$0xff]
    %v365 = vld [vmem:[%s357 + $0x38] sm:$0xff]
    %v366 = vld [vmem:[%s357 + $0x40] sm:$0xff]
    %v367 = vld [vmem:[%s357 + $0x48] sm:$0xff]
    %v368 = vld [vmem:[%s357 + $0x50] sm:$0xff]
    %v369 = vld [vmem:[%s357 + $0x58] sm:$0xff]
    %v370 = vld [vmem:[%s357 + $0x60] sm:$0xff]
    %v371 = vld [vmem:[%s357 + $0x68] sm:$0xff]
    %v372 = vld [vmem:[%s357 + $0x70] sm:$0xff]
    %v373 = vld [vmem:[%s357 + $0x78] sm:$0xff]
    %v374 = vld [vmem:[%s357 + $0x80] sm:$0xff]
    %v375 = vld [vmem:[%s357 + $0x88] sm:$0xff]
    %v376 = vld [vmem:[%s357 + $0x90] sm:$0xff]
    %v377 = vld [vmem:[%s357 + $0x98] sm:$0xff]
    %v378 = vld [vmem:[%s357 + $0xa0] sm:$0xff]
    %v379 = vld [vmem:[%s357 + $0xa8] sm:$0xff]
    %v380 = vld [vmem:[%s357 + $0xb0] sm:$0xff]
    %v381 = vld [vmem:[%s357 + $0xb8] sm:$0xff]
    %v382 = vld [vmem:[%s357 + $0xc0] sm:$0xff]
    %v383 = vld [vmem:[%s357 + $0xc8] sm:$0xff]
    %v384 = vld [vmem:[%s357 + $0xd0] sm:$0xff]
    %v385 = vld [vmem:[%s357 + $0xd8] sm:$0xff]
    %v386 = vld [vmem:[%s357 + $0xe0] sm:$0xff]
    %v387 = vld [vmem:[%s357 + $0xe8] sm:$0xff]
    %v388 = vld [vmem:[%s357 + $0xf0] sm:$0xff]
    %v389 = vld [vmem:[%s357 + $0xf8] sm:$0xff]
    %v390 = vld [vmem:[%s357 + $0x100] sm:$0xff]
    %v391 = vld [vmem:[%s357 + $0x108] sm:$0xff]
    %v392 = vld [vmem:[%s357 + $0x110] sm:$0xff]
    %v393 = vld [vmem:[%s357 + $0x118] sm:$0xff]
    %v394 = vld [vmem:[%s357 + $0x120] sm:$0xff]
    %v395 = vld [vmem:[%s357 + $0x128] sm:$0xff]
    %v396 = vld [vmem:[%s357 + $0x130] sm:$0xff]
    %v397 = vld [vmem:[%s357 + $0x138] sm:$0xff]
    %v398 = vld [vmem:[%s357 + $0x140] sm:$0xff]
    %v399 = vld [vmem:[%s357 + $0x148] sm:$0xff]
    %v400 = vld [vmem:[%s357 + $0x150] sm:$0xff]
    %v401 = vld [vmem:[%s357 + $0x158] sm:$0xff]
    %v402 = vld [vmem:[%s357 + $0x160] sm:$0xff]
    %v403 = vld [vmem:[%s357 + $0x168] sm:$0xff]
    %v404 = vld [vmem:[%s357 + $0x170] sm:$0xff]
    %v405 = vld [vmem:[%s357 + $0x178] sm:$0xff]
    %v406 = vld [vmem:[%s357 + $0x180] sm:$0xff]
    %v407 = vld [vmem:[%s357 + $0x188] sm:$0xff]
    %v408 = vld [vmem:[%s357 + $0x190] sm:$0xff]
    %v409 = vld [vmem:[%s357 + $0x198] sm:$0xff]
    %v410 = vld [vmem:[%s357 + $0x1a0] sm:$0xff]
    %v411 = vld [vmem:[%s357 + $0x1a8] sm:$0xff]
    %v412 = vld [vmem:[%s357 + $0x1b0] sm:$0xff]
    %v413 = vld [vmem:[%s357 + $0x1b8] sm:$0xff]
    %v414 = vld [vmem:[%s357 + $0x1c0] sm:$0xff]
    %v415 = vld [vmem:[%s357 + $0x1c8] sm:$0xff]
    %v416 = vld [vmem:[%s357 + $0x1d0] sm:$0xff]
    %v417 = vld [vmem:[%s357 + $0x1d8] sm:$0xff]
    %v418 = vld [vmem:[%s357 + $0x1e0] sm:$0xff]
    %v419 = vld [vmem:[%s357 + $0x1e8] sm:$0xff]
    %v420 = vld [vmem:[%s357 + $0x1f0] sm:$0xff]
    %v421 = vld [vmem:[%s357 + $0x1f8] sm:$0xff]
    %s422 = scalar_lea.vmem %s4, 2
    %v423 = vld [vmem:[%s422] sm:$0x3]
    %v425 = vlaneseq
    %v426 = vshrl.u32 %v425, 7
    %v427 = vsub.s32 0, %v426
    %v428 = vrot.slane %v423, %v427
    %v429 = vlaneseq
    %v430 = vshrl.u32 %v429, 7
    %v431 = vsub.s32 1, %v430
    %v432 = vrot.slane %v423, %v431
    %435 = vmatprep.subr.mxu0 %v389
    %436 = vmatpush1.msra.mxu0 %v388
    %437 = vmatprep.subr.mxu0 %v387
    %438 = vmatpush1.msra.mxu0 %v386
    %439 = vmatprep.subr.mxu0 %v385
    %440 = vmatpush1.msra.mxu0 %v384
    %441 = vmatprep.subr.mxu0 %v383
    %442 = vmatpush1.msra.mxu0 %v382
    %443 = vmatprep.subr.mxu0 %v381
    %444 = vmatpush1.msra.mxu0 %v380
    %445 = vmatprep.subr.mxu0 %v379
    %446 = vmatpush1.msra.mxu0 %v378
    %447 = vmatprep.subr.mxu0 %v377
    %448 = vmatpush1.msra.mxu0 %v376
    %449 = vmatprep.subr.mxu0 %v375
    %450 = vmatpush1.msra.mxu0 %v374
    %451 = vmatprep.subr.mxu0 %v373
    %452 = vmatpush1.msra.mxu0 %v372
    %453 = vmatprep.subr.mxu0 %v371
    %454 = vmatpush1.msra.mxu0 %v370
    %455 = vmatprep.subr.mxu0 %v369
    %456 = vmatpush1.msra.mxu0 %v368
    %457 = vmatprep.subr.mxu0 %v367
    %458 = vmatpush1.msra.mxu0 %v366
    %459 = vmatprep.subr.mxu0 %v365
    %460 = vmatpush1.msra.mxu0 %v364
    %461 = vmatprep.subr.mxu0 %v363
    %462 = vmatpush1.msra.mxu0 %v362
    %463 = vmatprep.subr.mxu0 %v361
    %464 = vmatpush1.msra.mxu0 %v360
    %465 = vmatprep.subr.mxu0 %v359
    %466 = vmatpush1.msra.mxu0 %v358
    %467 = vmatprep.subr.mxu0 %v421
    %468 = vmatpush2.msra.mxu0 %v420
    %469 = vmatprep.subr.mxu0 %v419
    %470 = vmatpush2.msra.mxu0 %v418
    %471 = vmatprep.subr.mxu0 %v417
    %472 = vmatpush2.msra.mxu0 %v416
    %473 = vmatprep.subr.mxu0 %v415
    %474 = vmatpush2.msra.mxu0 %v414
    %475 = vmatprep.subr.mxu0 %v413
    %476 = vmatpush2.msra.mxu0 %v412
    %477 = vmatprep.subr.mxu0 %v411
    %478 = vmatpush2.msra.mxu0 %v410
    %479 = vmatprep.subr.mxu0 %v409
    %480 = vmatpush2.msra.mxu0 %v408
    %481 = vmatprep.subr.mxu0 %v407
    %482 = vmatpush2.msra.mxu0 %v406
    %483 = vmatprep.subr.mxu0 %v405
    %484 = vmatpush2.msra.mxu0 %v404
    %485 = vmatprep.subr.mxu0 %v403
    %486 = vmatpush2.msra.mxu0 %v402
    %487 = vmatprep.subr.mxu0 %v401
    %488 = vmatpush2.msra.mxu0 %v400
    %489 = vmatprep.subr.mxu0 %v399
    %490 = vmatpush2.msra.mxu0 %v398
    %491 = vmatprep.subr.mxu0 %v397
    %492 = vmatpush2.msra.mxu0 %v396
    %493 = vmatprep.subr.mxu0 %v395
    %494 = vmatpush2.msra.mxu0 %v394
    %495 = vmatprep.subr.mxu0 %v393
    %496 = vmatpush2.msra.mxu0 %v392
    %497 = vmatprep.subr.mxu0 %v391
    %498 = vmatpush2.msra.mxu0 %v390
    %499 = vmatprep.mubr.f32.mxu0 %v356
    %500 = vmatmul.mubr.f32.gmra.mxu0 %v355
    %v501 = vpop.f32.mrf.mxu0
    %v502 = vadd.f32 %v428, %v501
    %v503 = vpop.f32.mrf.mxu0
    %v504 = vadd.f32 %v432, %v503
    %505 = vdwg.mxu0
    %vm506 = vcmp.gt.f32.partialorder %v502, 0.0
    %vm507 = vcmp.gt.f32.partialorder %v504, 0.0
    %v508 = vmul.f32 %v502, 0.2
    %v509 = vmul.f32 %v504, 0.2
    %v510 = vsel %vm506, %v502, %v508
    %v511 = vsel %vm507, %v504, %v509
    %v512 = vld [vmem:[%s5] sm:$0xff]
    %v513 = vld [vmem:[%s5 + $0x8] sm:$0xff]
    %v514 = vld [vmem:[%s5 + $0x10] sm:$0xff]
    %v515 = vld [vmem:[%s5 + $0x18] sm:$0xff]
    %v516 = vld [vmem:[%s5 + $0x20] sm:$0xff]
    %v517 = vld [vmem:[%s5 + $0x28] sm:$0xff]
    %v518 = vld [vmem:[%s5 + $0x30] sm:$0xff]
    %v519 = vld [vmem:[%s5 + $0x38] sm:$0xff]
    %v520 = vld [vmem:[%s5 + $0x40] sm:$0xff]
    %v521 = vld [vmem:[%s5 + $0x48] sm:$0xff]
    %v522 = vld [vmem:[%s5 + $0x50] sm:$0xff]
    %v523 = vld [vmem:[%s5 + $0x58] sm:$0xff]
    %v524 = vld [vmem:[%s5 + $0x60] sm:$0xff]
    %v525 = vld [vmem:[%s5 + $0x68] sm:$0xff]
    %v526 = vld [vmem:[%s5 + $0x70] sm:$0xff]
    %v527 = vld [vmem:[%s5 + $0x78] sm:$0xff]
    %v528 = vld [vmem:[%s5 + $0x80] sm:$0xff]
    %v529 = vld [vmem:[%s5 + $0x88] sm:$0xff]
    %v530 = vld [vmem:[%s5 + $0x90] sm:$0xff]
    %v531 = vld [vmem:[%s5 + $0x98] sm:$0xff]
    %v532 = vld [vmem:[%s5 + $0xa0] sm:$0xff]
    %v533 = vld [vmem:[%s5 + $0xa8] sm:$0xff]
    %v534 = vld [vmem:[%s5 + $0xb0] sm:$0xff]
    %v535 = vld [vmem:[%s5 + $0xb8] sm:$0xff]
    %v536 = vld [vmem:[%s5 + $0xc0] sm:$0xff]
    %v537 = vld [vmem:[%s5 + $0xc8] sm:$0xff]
    %v538 = vld [vmem:[%s5 + $0xd0] sm:$0xff]
    %v539 = vld [vmem:[%s5 + $0xd8] sm:$0xff]
    %v540 = vld [vmem:[%s5 + $0xe0] sm:$0xff]
    %v541 = vld [vmem:[%s5 + $0xe8] sm:$0xff]
    %v542 = vld [vmem:[%s5 + $0xf0] sm:$0xff]
    %v543 = vld [vmem:[%s5 + $0xf8] sm:$0xff]
    %v544 = vld [vmem:[%s6] sm:$0x1]
    %v546 = vlaneseq
    %v547 = vshrl.u32 %v546, 7
    %v548 = vsub.s32 0, %v547
    %v549 = vrot.slane %v544, %v548
    %551 = vmatprep.subr.mxu0 0.0
    %552 = vmatpush1.msra.mxu0 %v527
    %553 = vmatprep.subr.mxu0 0.0
    %554 = vmatpush1.msra.mxu0 %v526
    %555 = vmatprep.subr.mxu0 0.0
    %556 = vmatpush1.msra.mxu0 %v525
    %557 = vmatprep.subr.mxu0 0.0
    %558 = vmatpush1.msra.mxu0 %v524
    %559 = vmatprep.subr.mxu0 0.0
    %560 = vmatpush1.msra.mxu0 %v523
    %561 = vmatprep.subr.mxu0 0.0
    %562 = vmatpush1.msra.mxu0 %v522
    %563 = vmatprep.subr.mxu0 0.0
    %564 = vmatpush1.msra.mxu0 %v521
    %565 = vmatprep.subr.mxu0 0.0
    %566 = vmatpush1.msra.mxu0 %v520
    %567 = vmatprep.subr.mxu0 0.0
    %568 = vmatpush1.msra.mxu0 %v519
    %569 = vmatprep.subr.mxu0 0.0
    %570 = vmatpush1.msra.mxu0 %v518
    %571 = vmatprep.subr.mxu0 0.0
    %572 = vmatpush1.msra.mxu0 %v517
    %573 = vmatprep.subr.mxu0 0.0
    %574 = vmatpush1.msra.mxu0 %v516
    %575 = vmatprep.subr.mxu0 0.0
    %576 = vmatpush1.msra.mxu0 %v515
    %577 = vmatprep.subr.mxu0 0.0
    %578 = vmatpush1.msra.mxu0 %v514
    %579 = vmatprep.subr.mxu0 0.0
    %580 = vmatpush1.msra.mxu0 %v513
    %581 = vmatprep.subr.mxu0 0.0
    %582 = vmatpush1.msra.mxu0 %v512
    %583 = vmatprep.subr.mxu0 0.0
    %584 = vmatpush2.msra.mxu0 %v543
    %585 = vmatprep.subr.mxu0 0.0
    %586 = vmatpush2.msra.mxu0 %v542
    %587 = vmatprep.subr.mxu0 0.0
    %588 = vmatpush2.msra.mxu0 %v541
    %589 = vmatprep.subr.mxu0 0.0
    %590 = vmatpush2.msra.mxu0 %v540
    %591 = vmatprep.subr.mxu0 0.0
    %592 = vmatpush2.msra.mxu0 %v539
    %593 = vmatprep.subr.mxu0 0.0
    %594 = vmatpush2.msra.mxu0 %v538
    %595 = vmatprep.subr.mxu0 0.0
    %596 = vmatpush2.msra.mxu0 %v537
    %597 = vmatprep.subr.mxu0 0.0
    %598 = vmatpush2.msra.mxu0 %v536
    %599 = vmatprep.subr.mxu0 0.0
    %600 = vmatpush2.msra.mxu0 %v535
    %601 = vmatprep.subr.mxu0 0.0
    %602 = vmatpush2.msra.mxu0 %v534
    %603 = vmatprep.subr.mxu0 0.0
    %604 = vmatpush2.msra.mxu0 %v533
    %605 = vmatprep.subr.mxu0 0.0
    %606 = vmatpush2.msra.mxu0 %v532
    %607 = vmatprep.subr.mxu0 0.0
    %608 = vmatpush2.msra.mxu0 %v531
    %609 = vmatprep.subr.mxu0 0.0
    %610 = vmatpush2.msra.mxu0 %v530
    %611 = vmatprep.subr.mxu0 0.0
    %612 = vmatpush2.msra.mxu0 %v529
    %613 = vmatprep.subr.mxu0 0.0
    %614 = vmatpush2.msra.mxu0 %v528
    %615 = vmatprep.mubr.f32.mxu0 %v511
    %616 = vmatmul.mubr.f32.gmra.mxu0 %v510
    %v617 = vpop.f32.mrf.mxu0
    %v618 = vadd.f32 %v549, %v617
    %v619 = vpop.f32.mrf.mxu0
    %620 = vdwg.mxu0
    %vm621 = vcmask 58368
    %v622 = vsel %vm621, %v618, -inf
    %623 = vmax.xlane.f32.xlu0 %v622
    %v624 = vpop.xlane.xlu0 %623
    %v625 = vsub.f32 %v618, %v624
    %v626 = vmul.f32 %v625, 1.442695
    %v627 = vpow.pop %v626
    %v628 = vsel %vm621, %v627, 0.0
    %629 = vadd.xlane.f32.xlu0 %v628
    %v630 = vpop.xlane.xlu0 %629
    %v631 = vrcp.pop %v630
    %v632 = vmul.f32 %v627, %v631
    %v633 = vsub.f32 0.0, %v618
    %v634 = vmul.f32 %v633, 1.442695
    %v635 = vpow.pop %v634
    %v636 = vadd.f32 %v635, 1.0
    %v637 = vrcp.pop %v636
    %v638 = vmul.f32 1.0, %v637
    %v639 = vld [vmem:[#allocation5] sm:$0xff]
    %v640 = vld [vmem:[#allocation5 + $0x8] sm:$0xff]
    %v641 = vld [vmem:[#allocation5 + $0x10] sm:$0xff]
    %v642 = vld [vmem:[#allocation5 + $0x18] sm:$0xff]
    %v643 = vld [vmem:[#allocation5 + $0x20] sm:$0xff]
    %v644 = vld [vmem:[#allocation5 + $0x28] sm:$0xff]
    %v645 = vld [vmem:[#allocation5 + $0x30] sm:$0xff]
    %v646 = vld [vmem:[#allocation5 + $0x38] sm:$0xff]
    %v647 = vld [vmem:[#allocation5 + $0x40] sm:$0xff]
    %v648 = vld [vmem:[#allocation5 + $0x48] sm:$0xff]
    %v649 = vld [vmem:[#allocation5 + $0x50] sm:$0xff]
    %v650 = vld [vmem:[#allocation5 + $0x58] sm:$0xff]
    %v651 = vld [vmem:[#allocation5 + $0x60] sm:$0xff]
    %v652 = vld [vmem:[#allocation5 + $0x68] sm:$0xff]
    %v653 = vld [vmem:[#allocation5 + $0x70] sm:$0xff]
    %v654 = vld [vmem:[#allocation5 + $0x78] sm:$0xff]
    %s656 = vtos %v632
    %v657 = vstv %s656
    %v659 = vmul.f32 %v657, %v639
    %v660 = vmul.f32 %v657, %v640
    %v661 = vadd.f32 %v659, 0.0
    %v662 = vadd.f32 %v660, 0.0
    %663 = vrot.lane.b32.xlu0 %v632, 127
    %v664 = vpop.permute.xlu0 %663
    %s665 = vtos %v664
    %v666 = vstv %s665
    %v668 = vmul.f32 %v666, %v641
    %v669 = vmul.f32 %v666, %v642
    %v670 = vadd.f32 %v661, %v668
    %v671 = vadd.f32 %v662, %v669
    %672 = vrot.lane.b32.xlu0 %v632, 126
    %v673 = vpop.permute.xlu0 %672
    %s674 = vtos %v673
    %v675 = vstv %s674
    %v677 = vmul.f32 %v675, %v643
    %v678 = vmul.f32 %v675, %v644
    %v679 = vadd.f32 %v670, %v677
    %v680 = vadd.f32 %v671, %v678
    %681 = vrot.lane.b32.xlu0 %v632, 125
    %v682 = vpop.permute.xlu0 %681
    %s683 = vtos %v682
    %v684 = vstv %s683
    %v686 = vmul.f32 %v684, %v645
    %v687 = vmul.f32 %v684, %v646
    %v688 = vadd.f32 %v679, %v686
    %v689 = vadd.f32 %v680, %v687
    %690 = vrot.lane.b32.xlu0 %v632, 124
    %v691 = vpop.permute.xlu0 %690
    %s692 = vtos %v691
    %v693 = vstv %s692
    %v695 = vmul.f32 %v693, %v647
    %v696 = vmul.f32 %v693, %v648
    %v697 = vadd.f32 %v688, %v695
    %v698 = vadd.f32 %v689, %v696
    %699 = vrot.lane.b32.xlu0 %v632, 123
    %v700 = vpop.permute.xlu0 %699
    %s701 = vtos %v700
    %v702 = vstv %s701
    %v704 = vmul.f32 %v702, %v649
    %v705 = vmul.f32 %v702, %v650
    %v706 = vadd.f32 %v697, %v704
    %v707 = vadd.f32 %v698, %v705
    %708 = vrot.lane.b32.xlu0 %v632, 122
    %v709 = vpop.permute.xlu0 %708
    %s710 = vtos %v709
    %v711 = vstv %s710
    %v713 = vmul.f32 %v711, %v651
    %v714 = vmul.f32 %v711, %v652
    %v715 = vadd.f32 %v706, %v713
    %v716 = vadd.f32 %v707, %v714
    %717 = vrot.lane.b32.xlu0 %v632, 121
    %v718 = vpop.permute.xlu0 %717
    %s719 = vtos %v718
    %v720 = vstv %s719
    %v722 = vmul.f32 %v720, %v653
    %v723 = vmul.f32 %v720, %v654
    %v724 = vadd.f32 %v715, %v722
    %v725 = vadd.f32 %v716, %v723
    %vm726 = vcmask 130048
    %v728 = vsel %vm726, %v724, 0
    %v731 = vsel %vm726, %v725, 0
    %733 = vmatprep.subr.mxu0 0.0
    %734 = vmatpush1.msra.mxu0 0.0
    %735 = vmatprep.subr.mxu0 0.0
    %736 = vmatpush1.msra.mxu0 0.0
    %737 = vmatprep.subr.mxu0 0.0
    %738 = vmatpush1.msra.mxu0 0.0
    %739 = vmatprep.subr.mxu0 0.0
    %740 = vmatpush1.msra.mxu0 0.0
    %741 = vmatprep.subr.mxu0 0.0
    %742 = vmatpush1.msra.mxu0 0.0
    %743 = vmatprep.subr.mxu0 0.0
    %744 = vmatpush1.msra.mxu0 0.0
    %745 = vmatprep.subr.mxu0 0.0
    %746 = vmatpush1.msra.mxu0 0.0
    %747 = vmatprep.subr.mxu0 0.0
    %748 = vmatpush1.msra.mxu0 0.0
    %749 = vmatprep.subr.mxu0 0.0
    %750 = vmatpush1.msra.mxu0 0.0
    %751 = vmatprep.subr.mxu0 0.0
    %752 = vmatpush1.msra.mxu0 0.0
    %753 = vmatprep.subr.mxu0 0.0
    %754 = vmatpush1.msra.mxu0 0.0
    %755 = vmatprep.subr.mxu0 0.0
    %756 = vmatpush1.msra.mxu0 0.0
    %757 = vmatprep.subr.mxu0 0.0
    %758 = vmatpush1.msra.mxu0 0.0
    %759 = vmatprep.subr.mxu0 0.0
    %760 = vmatpush1.msra.mxu0 0.0
    %761 = vmatprep.subr.mxu0 0.0
    %762 = vmatpush1.msra.mxu0 %v59
    %763 = vmatprep.subr.mxu0 0.0
    %764 = vmatpush1.msra.mxu0 %v58
    %765 = vmatprep.subr.mxu0 0.0
    %766 = vmatpush2.msra.mxu0 0.0
    %767 = vmatprep.subr.mxu0 0.0
    %768 = vmatpush2.msra.mxu0 0.0
    %769 = vmatprep.subr.mxu0 0.0
    %770 = vmatpush2.msra.mxu0 0.0
    %771 = vmatprep.subr.mxu0 0.0
    %772 = vmatpush2.msra.mxu0 0.0
    %773 = vmatprep.subr.mxu0 0.0
    %774 = vmatpush2.msra.mxu0 0.0
    %775 = vmatprep.subr.mxu0 0.0
    %776 = vmatpush2.msra.mxu0 0.0
    %777 = vmatprep.subr.mxu0 0.0
    %778 = vmatpush2.msra.mxu0 0.0
    %779 = vmatprep.subr.mxu0 0.0
    %780 = vmatpush2.msra.mxu0 0.0
    %781 = vmatprep.subr.mxu0 0.0
    %782 = vmatpush2.msra.mxu0 0.0
    %783 = vmatprep.subr.mxu0 0.0
    %784 = vmatpush2.msra.mxu0 0.0
    %785 = vmatprep.subr.mxu0 0.0
    %786 = vmatpush2.msra.mxu0 0.0
    %787 = vmatprep.subr.mxu0 0.0
    %788 = vmatpush2.msra.mxu0 0.0
    %789 = vmatprep.subr.mxu0 0.0
    %790 = vmatpush2.msra.mxu0 0.0
    %791 = vmatprep.subr.mxu0 0.0
    %792 = vmatpush2.msra.mxu0 0.0
    %793 = vmatprep.subr.mxu0 0.0
    %794 = vmatpush2.msra.mxu0 0.0
    %795 = vmatprep.subr.mxu0 0.0
    %796 = vmatpush2.msra.mxu0 0.0
    %797 = vmatprep.mubr.f32.mxu0 0.0
    %798 = vmatmul.mubr.f32.gmra.mxu0 %v728
    %v799 = vpop.f32.mrf.mxu0
    %v800 = vadd.f32 0.0, %v799
    %v801 = vpop.f32.mrf.mxu0
    %802 = vmatprep.mubr.f32.mxu0 0.0
    %803 = vmatmul.mubr.f32.gmra.mxu0 %v731
    %v804 = vpop.f32.mrf.mxu0
    %v805 = vadd.f32 0.0, %v804
    %v806 = vpop.f32.mrf.mxu0
    %807 = vdwg.mxu0
    %809 = vrot.lane.b32.xlu0 %v638, 120
    %v810 = vpop.permute.xlu0 %809
    %s811 = vtos %v810
    %v812 = vstv %s811
    %v814 = vmul.f32 %v58, %v812
    %v815 = vmul.f32 %v59, %v812
    %v816 = vsub.f32 1.0, %v638
    %818 = vrot.lane.b32.xlu0 %v816, 120
    %v819 = vpop.permute.xlu0 %818
    %s820 = vtos %v819
    %v821 = vstv %s820
    %v823 = vmul.f32 %v800, %v821
    %v824 = vmul.f32 %v805, %v821
    %v825 = vadd.f32 %v814, %v823
    %v826 = vadd.f32 %v815, %v824
    %827 = vst [vmem:[#allocation7] sm:$0xff] %v825
    %828 = vst [vmem:[#allocation7 + $0x8] sm:$0xff] %v826
    %v829 = vrot.slane %v632, 1
    %s830 = vtos %v829
    %v831 = vstv %s830
    %v833 = vmul.f32 %v831, %v639
    %v834 = vmul.f32 %v831, %v640
    %v835 = vadd.f32 %v833, 0.0
    %v836 = vadd.f32 %v834, 0.0
    %837 = vrot.lane.b32.xlu0 %v829, 127
    %v838 = vpop.permute.xlu0 %837
    %s839 = vtos %v838
    %v840 = vstv %s839
    %v842 = vmul.f32 %v840, %v641
    %v843 = vmul.f32 %v840, %v642
    %v844 = vadd.f32 %v835, %v842
    %v845 = vadd.f32 %v836, %v843
    %846 = vrot.lane.b32.xlu0 %v829, 126
    %v847 = vpop.permute.xlu0 %846
    %s848 = vtos %v847
    %v849 = vstv %s848
    %v851 = vmul.f32 %v849, %v643
    %v852 = vmul.f32 %v849, %v644
    %v853 = vadd.f32 %v844, %v851
    %v854 = vadd.f32 %v845, %v852
    %855 = vrot.lane.b32.xlu0 %v829, 125
    %v856 = vpop.permute.xlu0 %855
    %s857 = vtos %v856
    %v858 = vstv %s857
    %v860 = vmul.f32 %v858, %v645
    %v861 = vmul.f32 %v858, %v646
    %v862 = vadd.f32 %v853, %v860
    %v863 = vadd.f32 %v854, %v861
    %864 = vrot.lane.b32.xlu0 %v829, 124
    %v865 = vpop.permute.xlu0 %864
    %s866 = vtos %v865
    %v867 = vstv %s866
    %v869 = vmul.f32 %v867, %v647
    %v870 = vmul.f32 %v867, %v648
    %v871 = vadd.f32 %v862, %v869
    %v872 = vadd.f32 %v863, %v870
    %873 = vrot.lane.b32.xlu0 %v829, 123
    %v874 = vpop.permute.xlu0 %873
    %s875 = vtos %v874
    %v876 = vstv %s875
    %v878 = vmul.f32 %v876, %v649
    %v879 = vmul.f32 %v876, %v650
    %v880 = vadd.f32 %v871, %v878
    %v881 = vadd.f32 %v872, %v879
    %882 = vrot.lane.b32.xlu0 %v829, 122
    %v883 = vpop.permute.xlu0 %882
    %s884 = vtos %v883
    %v885 = vstv %s884
    %v887 = vmul.f32 %v885, %v651
    %v888 = vmul.f32 %v885, %v652
    %v889 = vadd.f32 %v880, %v887
    %v890 = vadd.f32 %v881, %v888
    %891 = vrot.lane.b32.xlu0 %v829, 121
    %v892 = vpop.permute.xlu0 %891
    %s893 = vtos %v892
    %v894 = vstv %s893
    %v896 = vmul.f32 %v894, %v653
    %v897 = vmul.f32 %v894, %v654
    %v898 = vadd.f32 %v889, %v896
    %v899 = vadd.f32 %v890, %v897
    %v901 = vsel %vm726, %v898, 0
    %v904 = vsel %vm726, %v899, 0
    %906 = vmatprep.subr.mxu0 0.0
    %907 = vmatpush1.msra.mxu0 0.0
    %908 = vmatprep.subr.mxu0 0.0
    %909 = vmatpush1.msra.mxu0 0.0
    %910 = vmatprep.subr.mxu0 0.0
    %911 = vmatpush1.msra.mxu0 0.0
    %912 = vmatprep.subr.mxu0 0.0
    %913 = vmatpush1.msra.mxu0 0.0
    %914 = vmatprep.subr.mxu0 0.0
    %915 = vmatpush1.msra.mxu0 0.0
    %916 = vmatprep.subr.mxu0 0.0
    %917 = vmatpush1.msra.mxu0 0.0
    %918 = vmatprep.subr.mxu0 0.0
    %919 = vmatpush1.msra.mxu0 0.0
    %920 = vmatprep.subr.mxu0 0.0
    %921 = vmatpush1.msra.mxu0 0.0
    %922 = vmatprep.subr.mxu0 0.0
    %923 = vmatpush1.msra.mxu0 0.0
    %924 = vmatprep.subr.mxu0 0.0
    %925 = vmatpush1.msra.mxu0 0.0
    %926 = vmatprep.subr.mxu0 0.0
    %927 = vmatpush1.msra.mxu0 0.0
    %928 = vmatprep.subr.mxu0 0.0
    %929 = vmatpush1.msra.mxu0 0.0
    %930 = vmatprep.subr.mxu0 0.0
    %931 = vmatpush1.msra.mxu0 0.0
    %932 = vmatprep.subr.mxu0 0.0
    %933 = vmatpush1.msra.mxu0 0.0
    %934 = vmatprep.subr.mxu0 0.0
    %935 = vmatpush1.msra.mxu0 %v61
    %936 = vmatprep.subr.mxu0 0.0
    %937 = vmatpush1.msra.mxu0 %v60
    %938 = vmatprep.subr.mxu0 0.0
    %939 = vmatpush2.msra.mxu0 0.0
    %940 = vmatprep.subr.mxu0 0.0
    %941 = vmatpush2.msra.mxu0 0.0
    %942 = vmatprep.subr.mxu0 0.0
    %943 = vmatpush2.msra.mxu0 0.0
    %944 = vmatprep.subr.mxu0 0.0
    %945 = vmatpush2.msra.mxu0 0.0
    %946 = vmatprep.subr.mxu0 0.0
    %947 = vmatpush2.msra.mxu0 0.0
    %948 = vmatprep.subr.mxu0 0.0
    %949 = vmatpush2.msra.mxu0 0.0
    %950 = vmatprep.subr.mxu0 0.0
    %951 = vmatpush2.msra.mxu0 0.0
    %952 = vmatprep.subr.mxu0 0.0
    %953 = vmatpush2.msra.mxu0 0.0
    %954 = vmatprep.subr.mxu0 0.0
    %955 = vmatpush2.msra.mxu0 0.0
    %956 = vmatprep.subr.mxu0 0.0
    %957 = vmatpush2.msra.mxu0 0.0
    %958 = vmatprep.subr.mxu0 0.0
    %959 = vmatpush2.msra.mxu0 0.0
    %960 = vmatprep.subr.mxu0 0.0
    %961 = vmatpush2.msra.mxu0 0.0
    %962 = vmatprep.subr.mxu0 0.0
    %963 = vmatpush2.msra.mxu0 0.0
    %964 = vmatprep.subr.mxu0 0.0
    %965 = vmatpush2.msra.mxu0 0.0
    %966 = vmatprep.subr.mxu0 0.0
    %967 = vmatpush2.msra.mxu0 0.0
    %968 = vmatprep.subr.mxu0 0.0
    %969 = vmatpush2.msra.mxu0 0.0
    %970 = vmatprep.mubr.f32.mxu0 0.0
    %971 = vmatmul.mubr.f32.gmra.mxu0 %v901
    %v972 = vpop.f32.mrf.mxu0
    %v973 = vadd.f32 0.0, %v972
    %v974 = vpop.f32.mrf.mxu0
    %975 = vmatprep.mubr.f32.mxu0 0.0
    %976 = vmatmul.mubr.f32.gmra.mxu0 %v904
    %v977 = vpop.f32.mrf.mxu0
    %v978 = vadd.f32 0.0, %v977
    %v979 = vpop.f32.mrf.mxu0
    %980 = vdwg.mxu0
    %v981 = vrot.slane %v638, 1
    %982 = vrot.lane.b32.xlu0 %v981, 120
    %v983 = vpop.permute.xlu0 %982
    %s984 = vtos %v983
    %v985 = vstv %s984
    %v987 = vmul.f32 %v60, %v985
    %v988 = vmul.f32 %v61, %v985
    %v989 = vrot.slane %v816, 1
    %990 = vrot.lane.b32.xlu0 %v989, 120
    %v991 = vpop.permute.xlu0 %990
    %s992 = vtos %v991
    %v993 = vstv %s992
    %v995 = vmul.f32 %v973, %v993
    %v996 = vmul.f32 %v978, %v993
    %v997 = vadd.f32 %v987, %v995
    %v998 = vadd.f32 %v988, %v996
    %s999 = scalar_lea.vmem [#allocation7], 16
    %1000 = vst [vmem:[%s999] sm:$0xff] %v997
    %1001 = vst [vmem:[%s999 + $0x8] sm:$0xff] %v998
    // Predicated region
    $region42: #{tpu_custom_call.1} parent=1 // pred_check
      _
    $region43: #{tpu_custom_call.1} parent=1 // pred_check_branch
      %1003 = sbr.rel (0) target = $region45
    $region44: #{tpu_custom_call.1} parent=1 // pred_region
      %s1005 = ssub.s32 512, 512
      %1006 = vsyncadd [#allocation4], %s1005
      %s1007 = sshll.u32 [#allocation7], 4
      %s1008 = int_to_ptr.vmem [resolvable:$true] %s1007
      %1013 = dma.vmem_to_hbm [thread:$0]  %s1008, 512, %s8, [#allocation4], 128, 128, 8
    $region45: #{tpu_custom_call.1} parent=1 // pred_fallthru
      _
    // Predicated region
    $region46: #{tpu_custom_call.1} parent=1 // pred_check
      _
    $region47: #{tpu_custom_call.1} parent=1 // pred_check_branch
      %1015 = sbr.rel (0) target = $region49
    $region48: #{tpu_custom_call.1} parent=1 // pred_region
      %1016 = dma.done [#allocation4], 512
    $region49: #{tpu_custom_call.1} parent=1 // pred_fallthru
      _
    %1017 = vsyncpa [#allocation3], 1
    %1018 = vsyncpa [#allocation6], 1
    %1019 = vsyncpa [#allocation4], 1

</llo_original>
